<compile_context>
chip_gen: v6e
topology: v6e:2x2x1
jax: 0.10.0
libtpu: 0.0.40
codegen_flags: <defaults>
</compile_context>

<pallas_src>
import functools

import jax
import jax.numpy as jnp
from jax.experimental import pallas as pl
from jax.experimental.pallas import tpu as pltpu

_LANE = 128


def _round_up(x, m):
    return ((x + m - 1) // m) * m


# -----------------------------------------------------------------------------
# Kernel
# -----------------------------------------------------------------------------
def actor_kernel(x_ref, w_ref, b_ref, probs_ref, xpad_ref, *,
                 state_dim, action_dim):
    """Fused 3-layer MLP + masked softmax over one (TB, ...) batch tile.

    x_ref     : (TB, state_dim) f32   -- raw, unpadded states
    w_ref     : (3, P, P)       bf16  -- zero-padded [W1, W2, W3], (in, out)
    b_ref     : (3, 1, P)       f32   -- zero-padded [b1, b2, b3]
    probs_ref : (TB, P)         bf16  -- padded probabilities (lane-dense)
    xpad_ref  : (TB, P)         f32   -- VMEM staging buffer for lane padding
    """
    P = xpad_ref.shape[-1]

    # Lane-pad the raw states entirely inside VMEM (no HBM round-trip):
    # zero the staging buffer, drop the real state_dim columns in, reload.
    xpad_ref[...] = jnp.zeros_like(xpad_ref)
    xpad_ref[:, :state_dim] = x_ref[...]
    x = xpad_ref[...].astype(jnp.bfloat16)          # bf16 only into the MXU

    # Layer 1: Linear (MXU, bf16 in / f32 acc) + bias + ReLU (f32 VPU).
    h1 = jnp.dot(x, w_ref[0], preferred_element_type=jnp.float32)
    h1 = jnp.maximum(h1 + b_ref[0], 0.0)

    # Layer 2
    h2 = jnp.dot(h1.astype(jnp.bfloat16), w_ref[1],
                 preferred_element_type=jnp.float32)
    h2 = jnp.maximum(h2 + b_ref[1], 0.0)

    # Layer 3 -> logits (f32)
    logits = jnp.dot(h2.astype(jnp.bfloat16), w_ref[2],
                     preferred_element_type=jnp.float32)
    logits = logits + b_ref[2]

    # Mask padded action columns.  Mask is applied to the f32 accumulator;
    # exp(-1e30 - m) underflows to exactly 0, so padded probs are exactly 0.
    lane = jax.lax.broadcasted_iota(jnp.int32, logits.shape, dimension=1)
    logits = jnp.where(lane < action_dim, logits, -1e30)

    # Numerically stable softmax (matches torch.nn.Softmax(dim=-1)).
    # All epilogue math in f32 (v5e has no bf16 VPU/EUP); cast only at store.
    m = jnp.max(logits, axis=-1, keepdims=True)
    e = jnp.exp(logits - m)
    denom = jnp.sum(e, axis=-1, keepdims=True)
    inv = pl.reciprocal(denom, approx=True)         # EUP slot, free next to exp
    probs_ref[...] = (e * inv).astype(probs_ref.dtype)


# -----------------------------------------------------------------------------
# Wrapper
# -----------------------------------------------------------------------------
def actor_forward(state, w_slab, b_slab, action_dim, *, block_b=1024):
    """Runs the fused actor kernel.

    Returns Categorical probabilities zero-padded to the 128-lane width:
    a (B, 128) bf16 array whose columns >= action_dim are exactly 0, so it can
    be consumed directly as Categorical probs without a post-kernel slice.
    """
    B, state_dim = state.shape
    P = w_slab.shape[-1]

    # Batch tile: big (default 1024) to amortize fixed per-grid-step overhead,
    # but capped so the grid has >= 2 steps whenever B allows it -- with
    # dimension_semantics=("parallel",) that keeps both v7x TensorCores busy.
    # TB is always a multiple of 8; ragged batches get a masked partial final
    # tile (grid = cdiv) instead of padding B up to a whole extra tile.
    TB = min(block_b, _round_up(pl.cdiv(_round_up(B, 8), 2), 8))
    grid = (pl.cdiv(B, TB),)

    return pl.pallas_call(
        functools.partial(actor_kernel, state_dim=state_dim,
                          action_dim=action_dim),
        out_shape=jax.ShapeDtypeStruct((B, P), jnp.bfloat16),
        grid=grid,
        in_specs=[
            # Raw f32 states straight from HBM: last block dim equals the full
            # array dim, so no 128-lane-padded copy is ever materialized.
            pl.BlockSpec((TB, state_dim), lambda i: (i, 0)),
            # Constant block index => weight/bias slabs are DMA'd once and
            # stay VMEM-resident across the whole grid.
            pl.BlockSpec((3, P, P), lambda i: (0, 0, 0)),
            pl.BlockSpec((3, 1, P), lambda i: (0, 0, 0)),
        ],
        out_specs=pl.BlockSpec((TB, P), lambda i: (i, 0)),
        scratch_shapes=[pltpu.VMEM((TB, P), jnp.float32)],
        compiler_params=pltpu.CompilerParams(
            dimension_semantics=("parallel",)),      # split batch on v7x
    )(state, w_slab, b_slab)


# -----------------------------------------------------------------------------
# Parameter construction (matches torch.nn.Linear default init)
# -----------------------------------------------------------------------------
def init_actor_params(key, state_dim, hidden_dim, action_dim):
    """U(-1/sqrt(fan_in), 1/sqrt(fan_in)) for weight and bias; weights stored
    as (in, out) (transpose of torch's (out, in)), biases as (1, out)."""
    keys = jax.random.split(key, 6)

    def linear(kw, kb, fan_in, fan_out):
        bound = 1.0 / jnp.sqrt(jnp.float32(fan_in))
        w = jax.random.uniform(kw, (fan_in, fan_out), jnp.float32, -bound, bound)
        b = jax.random.uniform(kb, (1, fan_out), jnp.float32, -bound, bound)
        return w, b

    w1, b1 = linear(keys[0], keys[1], state_dim, hidden_dim)
    w2, b2 = linear(keys[2], keys[3], hidden_dim, hidden_dim)
    w3, b3 = linear(keys[4], keys[5], hidden_dim, action_dim)
    return (w1, b1, w2, b2, w3, b3)


def pack_actor_params(raw_params, state_dim, hidden_dim, action_dim):
    """Pad every feature dim to the 128-lane width (P=128 here; never more)
    and pack: weights -> (3, P, P) bf16 slab, biases -> (3, 1, P) f32 slab."""
    w1, b1, w2, b2, w3, b3 = raw_params
    P = _round_up(max(state_dim, hidden_dim, action_dim), _LANE)

    def pad_w(w):
        return jnp.pad(w, ((0, P - w.shape[0]), (0, P - w.shape[1])))

    def pad_b(b):
        return jnp.pad(b, ((0, 0), (0, P - b.shape[1])))

    w_slab = jnp.stack([pad_w(w1), pad_w(w2), pad_w(w3)]).astype(jnp.bfloat16)
    b_slab = jnp.stack([pad_b(b1), pad_b(b2), pad_b(b3)]).astype(jnp.float32)
    return w_slab, b_slab


# -----------------------------------------------------------------------------
# Pure-JAX reference (same bf16-matmul / f32-softmax recipe as the kernel)
# -----------------------------------------------------------------------------
def _reference_forward(state, raw_params):
    w1, b1, w2, b2, w3, b3 = raw_params
    xb = state.astype(jnp.bfloat16)
    h1 = jnp.maximum(
        jnp.dot(xb, w1.astype(jnp.bfloat16),
                preferred_element_type=jnp.float32) + b1, 0.0)
    h2 = jnp.maximum(
        jnp.dot(h1.astype(jnp.bfloat16), w2.astype(jnp.bfloat16),
                preferred_element_type=jnp.float32) + b2, 0.0)
    logits = jnp.dot(h2.astype(jnp.bfloat16), w3.astype(jnp.bfloat16),
                     preferred_element_type=jnp.float32) + b3
    return jax.nn.softmax(logits, axis=-1)


if __name__ == "__main__":
    key = jax.random.PRNGKey(0)
    k_params, k_s1, k_s2, k_s3, k_a = jax.random.split(key, 5)

    STATE_DIM, HIDDEN_DIM, ACTION_DIM = 16, 32, 8

    raw = init_actor_params(k_params, STATE_DIM, HIDDEN_DIM, ACTION_DIM)
    w_slab, b_slab = pack_actor_params(raw, STATE_DIM, HIDDEN_DIM, ACTION_DIM)

    def run_and_check(state):
        B = state.shape[0]
        probs_pad = jax.block_until_ready(
            actor_forward(state, w_slab, b_slab, ACTION_DIM))
        assert probs_pad.shape == (B, w_slab.shape[-1])
        assert probs_pad.dtype == jnp.bfloat16
        # Padded action columns are exactly zero -> the padded array is a
        # valid Categorical parametrization as-is (no slice needed downstream).
        assert jnp.all(probs_pad[:, ACTION_DIM:] == 0)
        probs = probs_pad[:, :ACTION_DIM].astype(jnp.float32)  # test-only slice
        ref = _reference_forward(state, raw)
        assert jnp.allclose(probs, ref, atol=1.5e-2, rtol=5e-2)
        assert jnp.allclose(jnp.sum(probs, axis=-1), 1.0, atol=2e-2)
        return probs_pad

    # Small batch (spec-sized): single 8-row tile.
    run_and_check(jax.random.normal(k_s1, (8, STATE_DIM), jnp.float32))

    # Rollout-sized batch: 2 grid steps (v7x megacore friendly).
    probs_big = run_and_check(
        jax.random.normal(k_s2, (512, STATE_DIM), jnp.float32))

    # Ragged batch: masked partial final tile instead of padding to 2*TB rows.
    run_and_check(jax.random.normal(k_s3, (300, STATE_DIM), jnp.float32))

    # Categorical glue consuming the padded probs directly
    # (padded actions have exactly zero probability, i.e. -inf logit).
    actions = jax.random.categorical(
        k_a, jnp.log(probs_big.astype(jnp.float32)), axis=-1)
    assert jnp.all(actions < ACTION_DIM)

    print("KERNEL_OK")
</pallas_src>

<mosaic_0001>
module attributes {stable_mosaic.version = 11 : i64} {
  func.func @actor_kernel(%arg0: i32, %arg1: memref<8x16xf32, #tpu.memory_space<vmem>>, %arg2: memref<3x128x128xbf16, #tpu.memory_space<vmem>>, %arg3: memref<3x1x128xf32, #tpu.memory_space<vmem>>, %arg4: memref<8x128xbf16, #tpu.memory_space<vmem>>, %arg5: memref<8x128xf32, #tpu.memory_space<vmem>>) attributes {dimension_semantics = [#tpu.dimension_semantics<parallel>], iteration_bounds = array<i64: 1>, scalar_prefetch = 0 : i64, scratch_operands = 1 : i64, tpu.core_type = #tpu.core_type<tc>, window_params = [{transform_indices = @transform_0, window_bounds = array<i64: 8, 16>}, {pipeline_mode = #tpu.pipeline_mode<synchronous>, transform_indices = @transform_1, window_bounds = array<i64: 3, 128, 128>}, {pipeline_mode = #tpu.pipeline_mode<synchronous>, transform_indices = @transform_2, window_bounds = array<i64: 3, 1, 128>}, {transform_indices = @transform_3, window_bounds = array<i64: 8, 128>}]} {
    %cst = arith.constant 0.000000e+00 : f32
    %0 = vector.broadcast %cst : f32 to vector<8x128xf32>
    %c0 = arith.constant 0 : index
    %c0_0 = arith.constant 0 : index
    %1 = vector.load %arg5[%c0, %c0_0] : memref<8x128xf32, #tpu.memory_space<vmem>>, vector<8x128xf32>
    tpu.vector_store %arg5[%c0, %c0_0], %0 {strides = array<i32>} : memref<8x128xf32, #tpu.memory_space<vmem>>, vector<8x128xf32>,
    %c0_1 = arith.constant 0 : index
    %c0_2 = arith.constant 0 : index
    %2 = vector.load %arg1[%c0_1, %c0_2] : memref<8x16xf32, #tpu.memory_space<vmem>>, vector<8x16xf32>
    %c0_3 = arith.constant 0 : index
    %c0_4 = arith.constant 0 : index
    %3 = vector.load %arg5[%c0_3, %c0_4] : memref<8x128xf32, #tpu.memory_space<vmem>>, vector<8x16xf32>
    tpu.vector_store %arg5[%c0_3, %c0_4], %2 {strides = array<i32>} : memref<8x128xf32, #tpu.memory_space<vmem>>, vector<8x16xf32>,
    %c0_5 = arith.constant 0 : index
    %c0_6 = arith.constant 0 : index
    %4 = vector.load %arg5[%c0_5, %c0_6] : memref<8x128xf32, #tpu.memory_space<vmem>>, vector<8x128xf32>
    %5 = arith.truncf %4 : vector<8x128xf32> to vector<8x128xbf16>
    %c0_7 = arith.constant 0 : index
    %c0_8 = arith.constant 0 : index
    %c0_9 = arith.constant 0 : index
    %6 = vector.load %arg2[%c0_7, %c0_8, %c0_9] : memref<3x128x128xbf16, #tpu.memory_space<vmem>>, vector<1x128x128xbf16>
    %7 = vector.shape_cast %6 : vector<1x128x128xbf16> to vector<128x128xbf16>
    %cst_10 = arith.constant dense<0.000000e+00> : vector<8x128xf32>
    %8 = tpu.matmul %5, %7, %cst_10 {dimension_numbers = #tpu.dot_dimension_numbers<[1], [0], [0], [1], [0, 0, 1, 1], [], []>} : vector<8x128xbf16>, vector<128x128xbf16>, vector<8x128xf32> -> vector<8x128xf32>
    %c0_11 = arith.constant 0 : index
    %c0_12 = arith.constant 0 : index
    %c0_13 = arith.constant 0 : index
    %9 = vector.load %arg3[%c0_11, %c0_12, %c0_13] : memref<3x1x128xf32, #tpu.memory_space<vmem>>, vector<1x1x128xf32>
    %10 = vector.shape_cast %9 : vector<1x1x128xf32> to vector<1x128xf32>
    %11 = vector.broadcast %10 : vector<1x128xf32> to vector<8x128xf32>
    %12 = arith.addf %8, %11 : vector<8x128xf32>
    %cst_14 = arith.constant 0.000000e+00 : f32
    %13 = vector.broadcast %cst_14 : f32 to vector<8x128xf32>
    %14 = arith.maximumf %12, %13 : vector<8x128xf32>
    %15 = arith.truncf %14 : vector<8x128xf32> to vector<8x128xbf16>
    %c1 = arith.constant 1 : index
    %c0_15 = arith.constant 0 : index
    %c0_16 = arith.constant 0 : index
    %16 = vector.load %arg2[%c1, %c0_15, %c0_16] : memref<3x128x128xbf16, #tpu.memory_space<vmem>>, vector<1x128x128xbf16>
    %17 = vector.shape_cast %16 : vector<1x128x128xbf16> to vector<128x128xbf16>
    %cst_17 = arith.constant dense<0.000000e+00> : vector<8x128xf32>
    %18 = tpu.matmul %15, %17, %cst_17 {dimension_numbers = #tpu.dot_dimension_numbers<[1], [0], [0], [1], [0, 0, 1, 1], [], []>} : vector<8x128xbf16>, vector<128x128xbf16>, vector<8x128xf32> -> vector<8x128xf32>
    %c1_18 = arith.constant 1 : index
    %c0_19 = arith.constant 0 : index
    %c0_20 = arith.constant 0 : index
    %19 = vector.load %arg3[%c1_18, %c0_19, %c0_20] : memref<3x1x128xf32, #tpu.memory_space<vmem>>, vector<1x1x128xf32>
    %20 = vector.shape_cast %19 : vector<1x1x128xf32> to vector<1x128xf32>
    %21 = vector.broadcast %20 : vector<1x128xf32> to vector<8x128xf32>
    %22 = arith.addf %18, %21 : vector<8x128xf32>
    %cst_21 = arith.constant 0.000000e+00 : f32
    %23 = vector.broadcast %cst_21 : f32 to vector<8x128xf32>
    %24 = arith.maximumf %22, %23 : vector<8x128xf32>
    %25 = arith.truncf %24 : vector<8x128xf32> to vector<8x128xbf16>
    %c2 = arith.constant 2 : index
    %c0_22 = arith.constant 0 : index
    %c0_23 = arith.constant 0 : index
    %26 = vector.load %arg2[%c2, %c0_22, %c0_23] : memref<3x128x128xbf16, #tpu.memory_space<vmem>>, vector<1x128x128xbf16>
    %27 = vector.shape_cast %26 : vector<1x128x128xbf16> to vector<128x128xbf16>
    %cst_24 = arith.constant dense<0.000000e+00> : vector<8x128xf32>
    %28 = tpu.matmul %25, %27, %cst_24 {dimension_numbers = #tpu.dot_dimension_numbers<[1], [0], [0], [1], [0, 0, 1, 1], [], []>} : vector<8x128xbf16>, vector<128x128xbf16>, vector<8x128xf32> -> vector<8x128xf32>
    %c2_25 = arith.constant 2 : index
    %c0_26 = arith.constant 0 : index
    %c0_27 = arith.constant 0 : index
    %29 = vector.load %arg3[%c2_25, %c0_26, %c0_27] : memref<3x1x128xf32, #tpu.memory_space<vmem>>, vector<1x1x128xf32>
    %30 = vector.shape_cast %29 : vector<1x1x128xf32> to vector<1x128xf32>
    %31 = vector.broadcast %30 : vector<1x128xf32> to vector<8x128xf32>
    %32 = arith.addf %28, %31 : vector<8x128xf32>
    %33 = tpu.iota {dimensions = array<i32: 1>} : vector<8x128xi32>
    %c8_i32 = arith.constant 8 : i32
    %34 = vector.broadcast %c8_i32 : i32 to vector<8x128xi32>
    %35 = arith.cmpi slt, %33, %34 : vector<8x128xi32>
    %cst_28 = arith.constant -1.000000e+30 : f32
    %36 = vector.broadcast %cst_28 : f32 to vector<8x128xf32>
    %37 = arith.select %35, %32, %36 : vector<8x128xi1>, vector<8x128xf32>
    %cst_29 = arith.constant dense<0xFF800000> : vector<8xf32>
    %38 = vector.multi_reduction <maximumf>, %37, %cst_29 [1] : vector<8x128xf32> to vector<8xf32>
    %39 = vector.shape_cast %38 : vector<8xf32> to vector<8x1xf32>
    %40 = vector.broadcast %39 : vector<8x1xf32> to vector<8x128xf32>
    %41 = arith.subf %37, %40 : vector<8x128xf32>
    %42 = math.exp %41 : vector<8x128xf32>
    %cst_30 = arith.constant dense<0.000000e+00> : vector<8xf32>
    %43 = vector.multi_reduction <add>, %42, %cst_30 [1] : vector<8x128xf32> to vector<8xf32>
    %44 = vector.shape_cast %43 : vector<8xf32> to vector<8x1xf32>
    %45 = tpu.reciprocal %44 {approx = true} : vector<8x1xf32> -> vector<8x1xf32>
    %46 = vector.broadcast %45 : vector<8x1xf32> to vector<8x128xf32>
    %47 = arith.mulf %42, %46 : vector<8x128xf32>
    %48 = arith.truncf %47 : vector<8x128xf32> to vector<8x128xbf16>
    %c0_31 = arith.constant 0 : index
    %c0_32 = arith.constant 0 : index
    %49 = vector.load %arg4[%c0_31, %c0_32] : memref<8x128xbf16, #tpu.memory_space<vmem>>, vector<8x128xbf16>
    tpu.vector_store %arg4[%c0_31, %c0_32], %48 {strides = array<i32>} : memref<8x128xbf16, #tpu.memory_space<vmem>>, vector<8x128xbf16>,
    return
  }
  func.func @transform_0(%arg0: i32) -> (i32, i32) {
    %c0_i32 = arith.constant 0 : i32
    %c0_i32_0 = arith.constant 0 : i32
    return %arg0, %c0_i32 : i32, i32
  }
  func.func @transform_1(%arg0: i32) -> (i32, i32, i32) {
    %c0_i32 = arith.constant 0 : i32
    %c0_i32_0 = arith.constant 0 : i32
    %c0_i32_1 = arith.constant 0 : i32
    %c0_i32_2 = arith.constant 0 : i32
    return %c0_i32, %c0_i32_0, %c0_i32_1 : i32, i32, i32
  }
  func.func @transform_2(%arg0: i32) -> (i32, i32, i32) {
    %c0_i32 = arith.constant 0 : i32
    %c0_i32_0 = arith.constant 0 : i32
    %c0_i32_1 = arith.constant 0 : i32
    %c0_i32_2 = arith.constant 0 : i32
    return %c0_i32, %c0_i32_0, %c0_i32_1 : i32, i32, i32
  }
  func.func @transform_3(%arg0: i32) -> (i32, i32) {
    %c0_i32 = arith.constant 0 : i32
    %c0_i32_0 = arith.constant 0 : i32
    return %arg0, %c0_i32 : i32, i32
  }
}

</mosaic_0001>

<llo_original>
// kernel: tpu_custom_call.1
$region0: #{tpu_custom_call.1}
  #allocation0 [shape = 'u32[]', space=smem, size = 0x4, offset = 0x4, fixed_abs, tag = 'smem constant byte address 0x4 - core index']
  #allocation1 [shape = 'u32[144,128]{1,0:T(1,128)}', space=vmem, size = 0x12000, scoped, tag = 'internal scratch']
  #allocation2 [shape = 'f32[8,128]{1,0:T(8,128)}', space=vmem, size = 0x1000, scoped, tag = 'scratch operand']
  %s0 = inlined_call_operand.hbm [shape: f32[8,16], index: 0, kind: input, shape index: {}]
  %s1 = inlined_call_operand.hbm [shape: bf16[3,128,128], index: 1, kind: input, shape index: {}]
  %s2 = inlined_call_operand.vmem [shape: f32[3,1,128], index: 2, kind: input, shape index: {}]
  %s3 = inlined_call_operand.hbm [shape: bf16[8,128], index: 3, kind: output, shape index: {}]
  %s4 = sld [smem:[#allocation0]]
  $region30: #{tpu_custom_call.1} parent=0
    _
  %s6 = ssub.s32 1, %s4
  %s7 = scalar_select 0, %s6, %s4
  $region1: #{tpu_custom_call.1} parent=0
    #allocation3 [shape = 'u8[4096]{0}', space=vmem, size = 0x1000, scoped, tag = 'input window, operand 0, single buffered']
    #allocation4 [shape = 's32[1]{0}', space=sflag, size = 0x4, scoped, tag = 'scoped memory for tpu_custom_call.1']
    #allocation5 [shape = 's32[1]{0}', space=sflag, size = 0x4, scoped, tag = 'scoped memory for tpu_custom_call.1']
    #allocation6 [shape = 'u8[98304]{0}', space=vmem, size = 0x18000, scoped, tag = 'input window, operand 1, single buffered']
    #allocation7 [shape = 's32[1]{0}', space=sflag, size = 0x4, scoped, tag = 'scoped memory for tpu_custom_call.1']
    #allocation8 [shape = 'u8[2048]{0}', space=vmem, size = 0x800, scoped, tag = 'output window, operand 0, single buffered']
    %8 = vsyncpa [#allocation4], 0
    %9 = vsyncpa [#allocation7], 0
    %10 = vsyncpa [#allocation5], 0
    // Predicated region
    $region2: #{tpu_custom_call.1} parent=1 // pred_check
      _
    $region3: #{tpu_custom_call.1} parent=1 // pred_check_branch
      %12 = sbr.rel (0) target = $region5
    $region4: #{tpu_custom_call.1} parent=1 // pred_region
      %s14 = ssub.s32 128, 128
      %15 = vsyncadd [#allocation4], %s14
      %s17 = sshll.u32 [#allocation3], 4
      %s18 = int_to_ptr.vmem [resolvable:$true] %s17
      %20 = dma.hbm_to_vmem [thread:$0]  %s0, 128, %s18, [#allocation4]
    $region5: #{tpu_custom_call.1} parent=1 // pred_fallthru
      _
    // Predicated region
    $region6: #{tpu_custom_call.1} parent=1 // pred_check
      _
    $region7: #{tpu_custom_call.1} parent=1 // pred_check_branch
      %22 = sbr.rel (0) target = $region9
    $region8: #{tpu_custom_call.1} parent=1 // pred_region
      %s24 = ssub.s32 3072, 3072
      %25 = vsyncadd [#allocation7], %s24
      %s26 = sshll.u32 [#allocation6], 4
      %s27 = int_to_ptr.vmem [resolvable:$true] %s26
      %32 = dma.hbm_to_vmem [thread:$0]  %s1, 3072, %s27, [#allocation7], 64, 64, 4
    $region9: #{tpu_custom_call.1} parent=1 // pred_fallthru
      _
    // Predicated region
    $region10: #{tpu_custom_call.1} parent=1 // pred_check
      _
    $region11: #{tpu_custom_call.1} parent=1 // pred_check_branch
      %34 = sbr.rel (0) target = $region13
    $region12: #{tpu_custom_call.1} parent=1 // pred_region
      _
    $region13: #{tpu_custom_call.1} parent=1 // pred_fallthru
      _
    // Predicated region
    $region14: #{tpu_custom_call.1} parent=1 // pred_check
      _
    $region15: #{tpu_custom_call.1} parent=1 // pred_check_branch
      %36 = sbr.rel (0) target = $region17
    $region16: #{tpu_custom_call.1} parent=1 // pred_region
      %37 = dma.done [#allocation4], 128
    $region17: #{tpu_custom_call.1} parent=1 // pred_fallthru
      _
    // Predicated region
    $region18: #{tpu_custom_call.1} parent=1 // pred_check
      _
    $region19: #{tpu_custom_call.1} parent=1 // pred_check_branch
      %39 = sbr.rel (0) target = $region21
    $region20: #{tpu_custom_call.1} parent=1 // pred_region
      %40 = dma.done [#allocation7], 3072
    $region21: #{tpu_custom_call.1} parent=1 // pred_fallthru
      _
    %42 = vst [vmem:[#allocation2] sm:$0xff] 0.0
    %v43 = vld [vmem:[#allocation3] sm:$0xff]
    %vm44 = vcmask 130048
    %45 = vst.msk [vmem:[#allocation2] sm:$0xff] %vm44, %v43
    %v46 = vld [vmem:[#allocation2] sm:$0xff]
    %v47 = vpack.c.bf16 %v46, %v46
    %v48 = vld [vmem:[#allocation6] sm:$0xf]
    %v49 = vld [vmem:[#allocation6 + $0x4] sm:$0xf]
    %v50 = vld [vmem:[#allocation6 + $0x8] sm:$0xf]
    %v51 = vld [vmem:[#allocation6 + $0xc] sm:$0xf]
    %v52 = vld [vmem:[#allocation6 + $0x10] sm:$0xf]
    %v53 = vld [vmem:[#allocation6 + $0x14] sm:$0xf]
    %v54 = vld [vmem:[#allocation6 + $0x18] sm:$0xf]
    %v55 = vld [vmem:[#allocation6 + $0x1c] sm:$0xf]
    %v56 = vld [vmem:[#allocation6 + $0x20] sm:$0xf]
    %v57 = vld [vmem:[#allocation6 + $0x24] sm:$0xf]
    %v58 = vld [vmem:[#allocation6 + $0x28] sm:$0xf]
    %v59 = vld [vmem:[#allocation6 + $0x2c] sm:$0xf]
    %v60 = vld [vmem:[#allocation6 + $0x30] sm:$0xf]
    %v61 = vld [vmem:[#allocation6 + $0x34] sm:$0xf]
    %v62 = vld [vmem:[#allocation6 + $0x38] sm:$0xf]
    %v63 = vld [vmem:[#allocation6 + $0x3c] sm:$0xf]
    %v64 = vld [vmem:[%s2] sm:$0x1]
    %v66 = vlaneseq
    %v67 = vshrl.u32 %v66, 7
    %v68 = vsub.s32 0, %v67
    %v69 = vrot.slane %v64, %v68
    %v87 = vunpack.c.l.b16 %v48
    %v88 = vunpack.c.l.b16 %v49
    %v89 = vunpack.c.l.b16 %v50
    %v90 = vunpack.c.l.b16 %v51
    %v91 = vunpack.c.l.b16 %v52
    %v92 = vunpack.c.l.b16 %v53
    %v93 = vunpack.c.l.b16 %v54
    %v94 = vunpack.c.l.b16 %v55
    %v95 = vunpack.c.l.b16 %v56
    %v96 = vunpack.c.l.b16 %v57
    %v97 = vunpack.c.l.b16 %v58
    %v98 = vunpack.c.l.b16 %v59
    %v99 = vunpack.c.l.b16 %v60
    %v100 = vunpack.c.l.b16 %v61
    %v101 = vunpack.c.l.b16 %v62
    %v102 = vunpack.c.l.b16 %v63
    %v103 = vpack.c.b16 %v88, %v87
    %v104 = vpack.c.b16 %v90, %v89
    %v105 = vpack.c.b16 %v92, %v91
    %v106 = vpack.c.b16 %v94, %v93
    %v107 = vpack.c.b16 %v96, %v95
    %v108 = vpack.c.b16 %v98, %v97
    %v109 = vpack.c.b16 %v100, %v99
    %v110 = vpack.c.b16 %v102, %v101
    %119 = vmatprep.subr.bf16.mxu0 0
    %120 = vmatpush1.bf16.msra.mxu0 %v110
    %121 = vmatprep.subr.bf16.mxu0 0
    %122 = vmatpush1.bf16.msra.mxu0 %v109
    %123 = vmatprep.subr.bf16.mxu0 0
    %124 = vmatpush1.bf16.msra.mxu0 %v108
    %125 = vmatprep.subr.bf16.mxu0 0
    %126 = vmatpush1.bf16.msra.mxu0 %v107
    %127 = vmatprep.subr.bf16.mxu0 0
    %128 = vmatpush1.bf16.msra.mxu0 %v106
    %129 = vmatprep.subr.bf16.mxu0 0
    %130 = vmatpush1.bf16.msra.mxu0 %v105
    %131 = vmatprep.subr.bf16.mxu0 0
    %132 = vmatpush1.bf16.msra.mxu0 %v104
    %133 = vmatprep.subr.bf16.mxu0 0
    %134 = vmatpush1.bf16.msra.mxu0 %v103
    %135 = vmatprep.subr.bf16.mxu0 0
    %136 = vmatpush2.bf16.msra.mxu0 0
    %137 = vmatprep.subr.bf16.mxu0 0
    %138 = vmatpush2.bf16.msra.mxu0 0
    %139 = vmatprep.subr.bf16.mxu0 0
    %140 = vmatpush2.bf16.msra.mxu0 0
    %141 = vmatprep.subr.bf16.mxu0 0
    %142 = vmatpush2.bf16.msra.mxu0 0
    %143 = vmatprep.subr.bf16.mxu0 0
    %144 = vmatpush2.bf16.msra.mxu0 0
    %145 = vmatprep.subr.bf16.mxu0 0
    %146 = vmatpush2.bf16.msra.mxu0 0
    %147 = vmatprep.subr.bf16.mxu0 0
    %148 = vmatpush2.bf16.msra.mxu0 0
    %149 = vmatprep.subr.bf16.mxu0 0
    %150 = vmatpush2.bf16.msra.mxu0 0
    %151 = vmatprep.mubr.bf16.mxu0 0
    %152 = vmatmul.mubr.bf16.gmra.mxu0 %v47
    %v153 = vpop.f32.mrf.mxu0
    %v154 = vadd.f32 %v69, %v153
    %v155 = vpop.f32.mrf.mxu0
    %v156 = vpop.f32.mrf.mxu0
    %v157 = vpop.f32.mrf.mxu0
    %158 = vdwg.mxu0
    %v159 = vmax.f32 %v154, 0.0
    %v160 = vpack.c.bf16 %v159, %v159
    %s161 = scalar_lea.vmem [#allocation6], 64
    %v162 = vld [vmem:[%s161] sm:$0xf]
    %v163 = vld [vmem:[%s161 + $0x4] sm:$0xf]
    %v164 = vld [vmem:[%s161 + $0x8] sm:$0xf]
    %v165 = vld [vmem:[%s161 + $0xc] sm:$0xf]
    %v166 = vld [vmem:[%s161 + $0x10] sm:$0xf]
    %v167 = vld [vmem:[%s161 + $0x14] sm:$0xf]
    %v168 = vld [vmem:[%s161 + $0x18] sm:$0xf]
    %v169 = vld [vmem:[%s161 + $0x1c] sm:$0xf]
    %v170 = vld [vmem:[%s161 + $0x20] sm:$0xf]
    %v171 = vld [vmem:[%s161 + $0x24] sm:$0xf]
    %v172 = vld [vmem:[%s161 + $0x28] sm:$0xf]
    %v173 = vld [vmem:[%s161 + $0x2c] sm:$0xf]
    %v174 = vld [vmem:[%s161 + $0x30] sm:$0xf]
    %v175 = vld [vmem:[%s161 + $0x34] sm:$0xf]
    %v176 = vld [vmem:[%s161 + $0x38] sm:$0xf]
    %v177 = vld [vmem:[%s161 + $0x3c] sm:$0xf]
    %s178 = scalar_lea.vmem %s2, 1
    %v179 = vld [vmem:[%s178] sm:$0x1]
    %v181 = vlaneseq
    %v182 = vshrl.u32 %v181, 7
    %v183 = vsub.s32 0, %v182
    %v184 = vrot.slane %v179, %v183
    %v202 = vunpack.c.l.b16 %v162
    %v203 = vunpack.c.l.b16 %v163
    %v204 = vunpack.c.l.b16 %v164
    %v205 = vunpack.c.l.b16 %v165
    %v206 = vunpack.c.l.b16 %v166
    %v207 = vunpack.c.l.b16 %v167
    %v208 = vunpack.c.l.b16 %v168
    %v209 = vunpack.c.l.b16 %v169
    %v210 = vunpack.c.l.b16 %v170
    %v211 = vunpack.c.l.b16 %v171
    %v212 = vunpack.c.l.b16 %v172
    %v213 = vunpack.c.l.b16 %v173
    %v214 = vunpack.c.l.b16 %v174
    %v215 = vunpack.c.l.b16 %v175
    %v216 = vunpack.c.l.b16 %v176
    %v217 = vunpack.c.l.b16 %v177
    %v218 = vpack.c.b16 %v203, %v202
    %v219 = vpack.c.b16 %v205, %v204
    %v220 = vpack.c.b16 %v207, %v206
    %v221 = vpack.c.b16 %v209, %v208
    %v222 = vpack.c.b16 %v211, %v210
    %v223 = vpack.c.b16 %v213, %v212
    %v224 = vpack.c.b16 %v215, %v214
    %v225 = vpack.c.b16 %v217, %v216
    %234 = vmatprep.subr.bf16.mxu0 0
    %235 = vmatpush1.bf16.msra.mxu0 %v225
    %236 = vmatprep.subr.bf16.mxu0 0
    %237 = vmatpush1.bf16.msra.mxu0 %v224
    %238 = vmatprep.subr.bf16.mxu0 0
    %239 = vmatpush1.bf16.msra.mxu0 %v223
    %240 = vmatprep.subr.bf16.mxu0 0
    %241 = vmatpush1.bf16.msra.mxu0 %v222
    %242 = vmatprep.subr.bf16.mxu0 0
    %243 = vmatpush1.bf16.msra.mxu0 %v221
    %244 = vmatprep.subr.bf16.mxu0 0
    %245 = vmatpush1.bf16.msra.mxu0 %v220
    %246 = vmatprep.subr.bf16.mxu0 0
    %247 = vmatpush1.bf16.msra.mxu0 %v219
    %248 = vmatprep.subr.bf16.mxu0 0
    %249 = vmatpush1.bf16.msra.mxu0 %v218
    %250 = vmatprep.subr.bf16.mxu0 0
    %251 = vmatpush2.bf16.msra.mxu0 0
    %252 = vmatprep.subr.bf16.mxu0 0
    %253 = vmatpush2.bf16.msra.mxu0 0
    %254 = vmatprep.subr.bf16.mxu0 0
    %255 = vmatpush2.bf16.msra.mxu0 0
    %256 = vmatprep.subr.bf16.mxu0 0
    %257 = vmatpush2.bf16.msra.mxu0 0
    %258 = vmatprep.subr.bf16.mxu0 0
    %259 = vmatpush2.bf16.msra.mxu0 0
    %260 = vmatprep.subr.bf16.mxu0 0
    %261 = vmatpush2.bf16.msra.mxu0 0
    %262 = vmatprep.subr.bf16.mxu0 0
    %263 = vmatpush2.bf16.msra.mxu0 0
    %264 = vmatprep.subr.bf16.mxu0 0
    %265 = vmatpush2.bf16.msra.mxu0 0
    %266 = vmatprep.mubr.bf16.mxu0 0
    %267 = vmatmul.mubr.bf16.gmra.mxu0 %v160
    %v268 = vpop.f32.mrf.mxu0
    %v269 = vadd.f32 %v184, %v268
    %v270 = vpop.f32.mrf.mxu0
    %v271 = vpop.f32.mrf.mxu0
    %v272 = vpop.f32.mrf.mxu0
    %273 = vdwg.mxu0
    %v274 = vmax.f32 %v269, 0.0
    %v275 = vpack.c.bf16 %v274, %v274
    %s276 = scalar_lea.vmem [#allocation6], 128
    %v277 = vld [vmem:[%s276] sm:$0xf]
    %v278 = vld [vmem:[%s276 + $0x4] sm:$0xf]
    %v279 = vld [vmem:[%s276 + $0x8] sm:$0xf]
    %v280 = vld [vmem:[%s276 + $0xc] sm:$0xf]
    %v281 = vld [vmem:[%s276 + $0x10] sm:$0xf]
    %v282 = vld [vmem:[%s276 + $0x14] sm:$0xf]
    %v283 = vld [vmem:[%s276 + $0x18] sm:$0xf]
    %v284 = vld [vmem:[%s276 + $0x1c] sm:$0xf]
    %v285 = vld [vmem:[%s276 + $0x20] sm:$0xf]
    %v286 = vld [vmem:[%s276 + $0x24] sm:$0xf]
    %v287 = vld [vmem:[%s276 + $0x28] sm:$0xf]
    %v288 = vld [vmem:[%s276 + $0x2c] sm:$0xf]
    %v289 = vld [vmem:[%s276 + $0x30] sm:$0xf]
    %v290 = vld [vmem:[%s276 + $0x34] sm:$0xf]
    %v291 = vld [vmem:[%s276 + $0x38] sm:$0xf]
    %v292 = vld [vmem:[%s276 + $0x3c] sm:$0xf]
    %s293 = scalar_lea.vmem %s2, 2
    %v294 = vld [vmem:[%s293] sm:$0x1]
    %v296 = vlaneseq
    %v297 = vshrl.u32 %v296, 7
    %v298 = vsub.s32 0, %v297
    %v299 = vrot.slane %v294, %v298
    %v317 = vunpack.c.l.b16 %v277
    %v318 = vunpack.c.l.b16 %v278
    %v319 = vunpack.c.l.b16 %v279
    %v320 = vunpack.c.l.b16 %v280
    %v321 = vunpack.c.l.b16 %v281
    %v322 = vunpack.c.l.b16 %v282
    %v323 = vunpack.c.l.b16 %v283
    %v324 = vunpack.c.l.b16 %v284
    %v325 = vunpack.c.l.b16 %v285
    %v326 = vunpack.c.l.b16 %v286
    %v327 = vunpack.c.l.b16 %v287
    %v328 = vunpack.c.l.b16 %v288
    %v329 = vunpack.c.l.b16 %v289
    %v330 = vunpack.c.l.b16 %v290
    %v331 = vunpack.c.l.b16 %v291
    %v332 = vunpack.c.l.b16 %v292
    %v333 = vpack.c.b16 %v318, %v317
    %v334 = vpack.c.b16 %v320, %v319
    %v335 = vpack.c.b16 %v322, %v321
    %v336 = vpack.c.b16 %v324, %v323
    %v337 = vpack.c.b16 %v326, %v325
    %v338 = vpack.c.b16 %v328, %v327
    %v339 = vpack.c.b16 %v330, %v329
    %v340 = vpack.c.b16 %v332, %v331
    %349 = vmatprep.subr.bf16.mxu0 0
    %350 = vmatpush1.bf16.msra.mxu0 %v340
    %351 = vmatprep.subr.bf16.mxu0 0
    %352 = vmatpush1.bf16.msra.mxu0 %v339
    %353 = vmatprep.subr.bf16.mxu0 0
    %354 = vmatpush1.bf16.msra.mxu0 %v338
    %355 = vmatprep.subr.bf16.mxu0 0
    %356 = vmatpush1.bf16.msra.mxu0 %v337
    %357 = vmatprep.subr.bf16.mxu0 0
    %358 = vmatpush1.bf16.msra.mxu0 %v336
    %359 = vmatprep.subr.bf16.mxu0 0
    %360 = vmatpush1.bf16.msra.mxu0 %v335
    %361 = vmatprep.subr.bf16.mxu0 0
    %362 = vmatpush1.bf16.msra.mxu0 %v334
    %363 = vmatprep.subr.bf16.mxu0 0
    %364 = vmatpush1.bf16.msra.mxu0 %v333
    %365 = vmatprep.subr.bf16.mxu0 0
    %366 = vmatpush2.bf16.msra.mxu0 0
    %367 = vmatprep.subr.bf16.mxu0 0
    %368 = vmatpush2.bf16.msra.mxu0 0
    %369 = vmatprep.subr.bf16.mxu0 0
    %370 = vmatpush2.bf16.msra.mxu0 0
    %371 = vmatprep.subr.bf16.mxu0 0
    %372 = vmatpush2.bf16.msra.mxu0 0
    %373 = vmatprep.subr.bf16.mxu0 0
    %374 = vmatpush2.bf16.msra.mxu0 0
    %375 = vmatprep.subr.bf16.mxu0 0
    %376 = vmatpush2.bf16.msra.mxu0 0
    %377 = vmatprep.subr.bf16.mxu0 0
    %378 = vmatpush2.bf16.msra.mxu0 0
    %379 = vmatprep.subr.bf16.mxu0 0
    %380 = vmatpush2.bf16.msra.mxu0 0
    %381 = vmatprep.mubr.bf16.mxu0 0
    %382 = vmatmul.mubr.bf16.gmra.mxu0 %v275
    %v383 = vpop.f32.mrf.mxu0
    %v384 = vadd.f32 %v299, %v383
    %v385 = vpop.f32.mrf.mxu0
    %v386 = vpop.f32.mrf.mxu0
    %v387 = vpop.f32.mrf.mxu0
    %388 = vdwg.mxu0
    %v389 = vlaneseq
    %v390 = vand.u32 %v389, 127
    %vm391 = vcmp.lt.s32.totalorder %v390, 8
    %v392 = vsel %vm391, %v384, -1e+30
    %393 = vmax.xlane.f32.xlu0 %v392
    %v394 = vpop.xlane.xlu0 %393
    %v395 = vsub.f32 %v392, %v394
    %v396 = vmul.f32 %v395, 1.442695
    %v397 = vpow.pop %v396
    %398 = vadd.xlane.f32.xlu0 %v397
    %v399 = vpop.xlane.xlu0 %398
    %v400 = vrcp.pop %v399
    %v401 = vmul.f32 %v397, %v400
    %v402 = vpack.c.bf16 %v401, %v401
    %403 = vst [vmem:[#allocation8] sm:$0xf] %v402
    // Predicated region
    $region22: #{tpu_custom_call.1} parent=1 // pred_check
      _
    $region23: #{tpu_custom_call.1} parent=1 // pred_check_branch
      %405 = sbr.rel (0) target = $region25
    $region24: #{tpu_custom_call.1} parent=1 // pred_region
      %s407 = ssub.s32 64, 64
      %408 = vsyncadd [#allocation5], %s407
      %s410 = sshll.u32 [#allocation8], 4
      %s411 = int_to_ptr.vmem [resolvable:$true] %s410
      %413 = dma.vmem_to_hbm [thread:$0]  %s411, 64, %s3, [#allocation5]
    $region25: #{tpu_custom_call.1} parent=1 // pred_fallthru
      _
    // Predicated region
    $region26: #{tpu_custom_call.1} parent=1 // pred_check
      _
    $region27: #{tpu_custom_call.1} parent=1 // pred_check_branch
      %415 = sbr.rel (0) target = $region29
    $region28: #{tpu_custom_call.1} parent=1 // pred_region
      %416 = dma.done [#allocation5], 64
    $region29: #{tpu_custom_call.1} parent=1 // pred_fallthru
      _
    %417 = vsyncpa [#allocation4], 1
    %418 = vsyncpa [#allocation7], 1
    %419 = vsyncpa [#allocation5], 1

</llo_original>
